<compile_context>
chip_gen: v7x
topology: tpu7x:2x2x1
jax: 0.10.0
libtpu: 0.0.40
codegen_flags: <defaults>
</compile_context>

<pallas_src>
import functools

import jax
import jax.numpy as jnp
from jax.experimental import pallas as pl
from jax.experimental.pallas import tpu as pltpu


def _round_up(a, b):
    return (a + b - 1) // b * b


def _vmem_capacity_bytes():
    """Physical VMEM per core; conservative fallback if the query is unavailable."""
    try:
        cap = getattr(pltpu.get_tpu_info(), "vmem_capacity_bytes", None)
        if cap:
            return int(cap)
    except Exception:
        pass
    return 64 * 1024 * 1024  # v7x per-TC size: a safe lower bound everywhere


# ----------------------------------------------------------------------------
# Pallas kernel: one (batch element, P-tile) per grid step.
# ----------------------------------------------------------------------------
def _dcn_relu6_kernel(y_ref, x_ref, m_ref, xf_ref, w_ref, b_ref, o_ref,
                      col_ref, *, H, W, Wp, Cp):
    K = y_ref.shape[1]          # kh*kw taps
    TP = y_ref.shape[2]         # TILE_P lanes
    HWp = H * Wp

    xf = xf_ref[0]              # (Cp, H*Wp) bf16; column index = h*Wp + w

    # Loop-invariant index grids for the one-hot construction (hoisted).
    iota_h = jax.lax.broadcasted_iota(jnp.int32, (H, TP), 0)
    iota_w = jax.lax.broadcasted_iota(jnp.int32, (Wp, TP), 0)

    def tap(k, carry):
        # Dynamic size-1 sublane loads of this tap's coordinates / mask.
        yk = y_ref[0, pl.ds(k, 1), :]                  # (1, TP)
        xk = x_ref[0, pl.ds(k, 1), :]
        mk = m_ref[0, pl.ds(k, 1), :]

        y0f = jnp.floor(yk)
        x0f = jnp.floor(xk)
        ly = yk - y0f
        lx = xk - x0f
        y0 = y0f.astype(jnp.int32)
        x0 = x0f.astype(jnp.int32)

        # Per-corner zero padding factorizes:
        #   1[valid_y & valid_x] * wy * wx == (1[valid_y]*wy) * (1[valid_x]*wx)
        # The modulation mask is folded into the y factor.
        wy0 = jnp.where((y0 >= 0) & (y0 < H), 1.0 - ly, 0.0) * mk
        wy1 = jnp.where((y0 >= -1) & (y0 < H - 1), ly, 0.0) * mk
        wx0 = jnp.where((x0 >= 0) & (x0 < W), 1.0 - lx, 0.0)
        wx1 = jnp.where((x0 >= -1) & (x0 < W - 1), lx, 0.0)

        # Tiny separable one-hots, then the dense (H*Wp, TP) gather matrix as
        # an outer product (~1 VPU op/element).  f32 so the sublane-collapse
        # reshape is (8,128)-tile aligned for any Wp % 8 == 0; cast to bf16
        # only for the MXU operand.
        gy = (jnp.where(iota_h == y0, wy0, 0.0) +
              jnp.where(iota_h == y0 + 1, wy1, 0.0))                  # (H, TP)
        gx = (jnp.where(iota_w == x0, wx0, 0.0) +
              jnp.where(iota_w == x0 + 1, wx1, 0.0))                  # (Wp, TP)
        g = (gy[:, None, :] * gx[None, :, :]).reshape(HWp, TP)
        g = g.astype(jnp.bfloat16)

        # Deep (H*Wp) MXU contraction, f32 accumulation; bf16 im2col rows
        # (halves scratch VMEM and store traffic vs the previous f32 scratch).
        sampled = jnp.dot(xf, g, preferred_element_type=jnp.float32)  # (Cp, TP)
        start = pl.multiple_of(k * Cp, Cp)                            # Cp % 16 == 0
        col_ref[pl.ds(start, Cp), :] = sampled.astype(jnp.bfloat16)
        return carry

    # fori_loop (not a static Python unroll) bounds per-tap live ranges.
    jax.lax.fori_loop(0, K, tap, 0)

    # Single well-shaped weight matmul: (C_out, K*Cp) @ (K*Cp, TP), f32 acc.
    acc = jnp.dot(w_ref[...], col_ref[...], preferred_element_type=jnp.float32)
    out = acc + b_ref[...]
    o_ref[0] = jnp.clip(out, 0.0, 6.0).astype(o_ref.dtype)            # ReLU6


# ----------------------------------------------------------------------------
# Wrapper: parameter/coordinate plumbing in plain JAX, hot path in Pallas.
# ----------------------------------------------------------------------------
def deform_conv_relu6_2d(x, offset, mask, weight, bias, *,
                         stride=(1, 1), padding=(1, 1), dilation=(1, 1),
                         tile_p=None):
    N, C_in, H, W = x.shape
    C_out, C_in_w, kh, kw = weight.shape
    assert C_in_w == C_in, "groups > 1 not supported"
    K = kh * kw
    sh, sw = stride
    ph, pw = padding
    dh, dw = dilation
    Ho = (H + 2 * ph - dh * (kh - 1) - 1) // sh + 1
    Wo = (W + 2 * pw - dw * (kw - 1) - 1) // sw + 1
    P = Ho * Wo

    if mask is None:
        mask = jnp.ones((N, K, Ho, Wo), x.dtype)

    # Fused sampling coordinates (static base grid + learned offsets), (N,K,P).
    ky = jnp.repeat(jnp.arange(kh) * dh, kw).astype(jnp.float32)          # (K,)
    kx = jnp.tile(jnp.arange(kw) * dw, kh).astype(jnp.float32)            # (K,)
    py = jnp.repeat(jnp.arange(Ho) * sh - ph, Wo).astype(jnp.float32)     # (P,)
    px = jnp.tile(jnp.arange(Wo) * sw - pw, Ho).astype(jnp.float32)       # (P,)
    off = offset.reshape(N, K, 2, P).astype(jnp.float32)    # (dy, dx) interleave
    yy = ky[None, :, None] + py[None, None, :] + off[:, :, 0, :]          # (N,K,P)
    xx = kx[None, :, None] + px[None, None, :] + off[:, :, 1, :]          # (N,K,P)
    mm = mask.reshape(N, K, P).astype(jnp.float32)

    # Channels padded to 16 (bf16 sublane tile: aligned im2col row stores),
    # width padded to 8 (f32 sublane tile: aligned reshape of the gather
    # matrix).  Zero padding contributes nothing to the output.
    Cp = _round_up(C_in, 16)
    Wp = _round_up(W, 8)
    HWp = H * Wp
    xp = jnp.pad(x.astype(jnp.float32),
                 ((0, 0), (0, Cp - C_in), (0, 0), (0, Wp - W)))
    # (N, Cp, H*Wp): column index = h*Wp + w.  bf16 MXU LHS, lane-dense block.
    xf = xp.reshape(N, Cp, HWp).astype(jnp.bfloat16)

    # im2col weight: (C_out, K*Cp), entry [o, k*Cp + c] = weight[o, c, ky, kx].
    wpad = jnp.pad(weight.astype(jnp.float32),
                   ((0, 0), (0, Cp - C_in), (0, 0), (0, 0)))
    w2 = jnp.transpose(wpad, (0, 2, 3, 1)).reshape(C_out, K * Cp)
    w2 = w2.astype(jnp.bfloat16)
    b2 = bias.reshape(C_out, 1).astype(jnp.float32)

    # Per-generation VMEM budget and lane-tile selection (v7x: 64 MiB/TC,
    # v5e/v6e: 128 MiB).
    vmem_cap = _vmem_capacity_bytes()
    vmem_budget = min(int(vmem_cap * 0.85), 112 * 1024 * 1024)
    if tile_p is None:
        tile_p = 1024 if vmem_cap >= 96 * 1024 * 1024 else 512

    def vmem_est(tp):
        coords = 3 * 2 * K * tp * 4                      # y/x/m, double buffered
        xf_buf = 2 * Cp * max(HWp, 128) * 2              # bf16, lane padded
        w_buf = 2 * C_out * max(K * Cp, 128) * 2
        col = K * Cp * tp * 2                            # bf16 im2col scratch
        g_live = HWp * tp * (4 + 2)                      # f32 outer prod + bf16 cast
        out_buf = 2 * C_out * tp * 4
        return coords + xf_buf + w_buf + col + g_live + out_buf + (2 << 20)

    TILE_P = min(_round_up(P, 128), _round_up(tile_p, 128))
    while TILE_P > 128 and vmem_est(TILE_P) > vmem_budget:
        TILE_P -= 128
    TILE_P = max(TILE_P, 128)

    P_pad = _round_up(P, TILE_P)
    if P_pad != P:
        pad3 = ((0, 0), (0, 0), (0, P_pad - P))
        yy = jnp.pad(yy, pad3)
        xx = jnp.pad(xx, pad3)
        mm = jnp.pad(mm, pad3)

    kernel = functools.partial(_dcn_relu6_kernel, H=H, W=W, Wp=Wp, Cp=Cp)

    out = pl.pallas_call(
        kernel,
        out_shape=jax.ShapeDtypeStruct((N, C_out, P_pad), jnp.float32),
        grid=(N, P_pad // TILE_P),
        in_specs=[
            pl.BlockSpec((1, K, TILE_P), lambda n, p: (n, 0, p)),     # y coords
            pl.BlockSpec((1, K, TILE_P), lambda n, p: (n, 0, p)),     # x coords
            pl.BlockSpec((1, K, TILE_P), lambda n, p: (n, 0, p)),     # mask
            pl.BlockSpec((1, Cp, HWp), lambda n, p: (n, 0, 0)),       # input (reused over p)
            pl.BlockSpec((C_out, K * Cp), lambda n, p: (0, 0)),       # weight
            pl.BlockSpec((C_out, 1), lambda n, p: (0, 0)),            # bias
        ],
        out_specs=pl.BlockSpec((1, C_out, TILE_P), lambda n, p: (n, 0, p)),
        scratch_shapes=[pltpu.VMEM((K * Cp, TILE_P), jnp.bfloat16)],  # bf16 im2col
        compiler_params=pltpu.CompilerParams(
            dimension_semantics=("parallel", "parallel"),
            vmem_limit_bytes=vmem_budget),
    )(yy, xx, mm, xf, w2, b2)

    return out[:, :, :P].reshape(N, C_out, Ho, Wo)


# ----------------------------------------------------------------------------
# Pure-JAX f32 reference (same semantics) for a correctness sanity check.
# ----------------------------------------------------------------------------
def _ref_deform_conv_relu6(x, offset, mask, weight, bias, *,
                           stride=(1, 1), padding=(1, 1), dilation=(1, 1)):
    N, C_in, H, W = x.shape
    C_out, _, kh, kw = weight.shape
    K = kh * kw
    sh, sw = stride
    ph, pw = padding
    dh, dw = dilation
    Ho = (H + 2 * ph - dh * (kh - 1) - 1) // sh + 1
    Wo = (W + 2 * pw - dw * (kw - 1) - 1) // sw + 1

    off = offset.reshape(N, K, 2, Ho, Wo)
    oy, ox = off[:, :, 0], off[:, :, 1]                    # (N, K, Ho, Wo)
    ky = jnp.repeat(jnp.arange(kh) * dh, kw).astype(jnp.float32)
    kx = jnp.tile(jnp.arange(kw) * dw, kh).astype(jnp.float32)
    base_y = ky[None, :, None, None] + (jnp.arange(Ho) * sh - ph)[None, None, :, None]
    base_x = kx[None, :, None, None] + (jnp.arange(Wo) * sw - pw)[None, None, None, :]
    yy = base_y + oy
    xx = base_x + ox

    def sample(img, y, x):                                  # img (C,H,W)
        y0 = jnp.floor(y); x0 = jnp.floor(x)
        ly, lx = y - y0, x - x0
        hy, hx = 1.0 - ly, 1.0 - lx
        y0i, x0i = y0.astype(jnp.int32), x0.astype(jnp.int32)
        acc = jnp.zeros((C_in,) + y.shape, jnp.float32)
        for yi, xi, wgt in [(y0i, x0i, hy * hx), (y0i, x0i + 1, hy * lx),
                            (y0i + 1, x0i, ly * hx), (y0i + 1, x0i + 1, ly * lx)]:
            valid = (yi >= 0) & (yi < H) & (xi >= 0) & (xi < W)
            v = img[:, jnp.clip(yi, 0, H - 1), jnp.clip(xi, 0, W - 1)]
            acc = acc + v * jnp.where(valid, wgt, 0.0)[None]
        return acc

    cols = jax.vmap(sample)(x, yy, xx)                      # (N, C_in, K, Ho, Wo)
    cols = cols * mask.reshape(N, 1, K, Ho, Wo)
    out = jnp.einsum('nckhw,ock->nohw', cols,
                     weight.reshape(C_out, C_in, K)) + bias[None, :, None, None]
    return jnp.clip(out, 0.0, 6.0)


if __name__ == "__main__":
    key = jax.random.PRNGKey(0)
    k1, k2, k3, k4, k5 = jax.random.split(key, 5)

    N, C_in, H, W = 2, 4, 16, 16
    C_out, kh, kw = 8, 3, 3
    stride, padding, dilation = (1, 1), (1, 1), (1, 1)
    Ho, Wo = 16, 16

    x = jax.random.normal(k1, (N, C_in, H, W), jnp.float32)
    offset = 0.5 * jax.random.normal(k2, (N, 2 * kh * kw, Ho, Wo), jnp.float32)
    mask = jax.nn.sigmoid(jax.random.normal(k3, (N, kh * kw, Ho, Wo), jnp.float32))
    weight = 0.1 * jax.random.normal(k4, (C_out, C_in, kh, kw), jnp.float32)
    bias = 0.1 * jax.random.normal(k5, (C_out,), jnp.float32)

    out = deform_conv_relu6_2d(x, offset, mask, weight, bias,
                               stride=stride, padding=padding, dilation=dilation)
    out = jax.block_until_ready(out)

    ref = _ref_deform_conv_relu6(x, offset, mask, weight, bias,
                                 stride=stride, padding=padding, dilation=dilation)
    ref = jax.block_until_ready(ref)

    assert out.shape == (N, C_out, Ho, Wo), out.shape
    assert bool(jnp.all(jnp.isfinite(out)))
    assert bool(jnp.all((out >= 0.0) & (out <= 6.0)))
    max_err = float(jnp.max(jnp.abs(out - ref)))
    # bf16 MXU operands / bf16 im2col (f32 accumulation) vs the pure-f32 reference.
    assert bool(jnp.allclose(out, ref, rtol=5e-2, atol=5e-2)), max_err

    print("KERNEL_OK")
</pallas_src>

<mosaic_0001>
module attributes {stable_mosaic.version = 11 : i64} {
  func.func @_dcn_relu6_kernel(%arg0: i32, %arg1: i32, %arg2: memref<1x9x256xf32, #tpu.memory_space<vmem>>, %arg3: memref<1x9x256xf32, #tpu.memory_space<vmem>>, %arg4: memref<1x9x256xf32, #tpu.memory_space<vmem>>, %arg5: memref<1x16x256xbf16, #tpu.memory_space<vmem>>, %arg6: memref<8x144xbf16, #tpu.memory_space<vmem>>, %arg7: memref<8x1xf32, #tpu.memory_space<vmem>>, %arg8: memref<1x8x256xf32, #tpu.memory_space<vmem>>, %arg9: memref<144x256xbf16, #tpu.memory_space<vmem>>) attributes {dimension_semantics = [#tpu.dimension_semantics<parallel>, #tpu.dimension_semantics<parallel>], iteration_bounds = array<i64: 2, 1>, scalar_prefetch = 0 : i64, scratch_operands = 1 : i64, tpu.core_type = #tpu.core_type<tc>, window_params = [{transform_indices = @transform_0, window_bounds = array<i64: 1, 9, 256>}, {transform_indices = @transform_1, window_bounds = array<i64: 1, 9, 256>}, {transform_indices = @transform_2, window_bounds = array<i64: 1, 9, 256>}, {transform_indices = @transform_3, window_bounds = array<i64: 1, 16, 256>}, {pipeline_mode = #tpu.pipeline_mode<synchronous>, transform_indices = @transform_4, window_bounds = array<i64: 8, 144>}, {pipeline_mode = #tpu.pipeline_mode<synchronous>, transform_indices = @transform_5, window_bounds = array<i64: 8, 1>}, {transform_indices = @transform_6, window_bounds = array<i64: 1, 8, 256>}]} {
    %c0 = arith.constant 0 : index
    %c0_0 = arith.constant 0 : index
    %c0_1 = arith.constant 0 : index
    %0 = vector.load %arg5[%c0, %c0_0, %c0_1] : memref<1x16x256xbf16, #tpu.memory_space<vmem>>, vector<1x16x256xbf16>
    %1 = vector.shape_cast %0 : vector<1x16x256xbf16> to vector<16x256xbf16>
    %2 = tpu.iota {dimensions = array<i32: 0>} : vector<16x256xi32>
    %3 = tpu.iota {dimensions = array<i32: 0>} : vector<16x256xi32>
    %c0_i32 = arith.constant 0 : i32
    %c9_i32 = arith.constant 9 : i32
    %4 = arith.addi %c0_i32, %c9_i32 : i32
    %c1_i32 = arith.constant 1 : i32
    scf.for %arg10 = %c0_i32 to %4 step %c1_i32  : i32 {
      %c0_14 = arith.constant 0 : index
      %18 = arith.index_cast %arg10 : i32 to index
      %c0_15 = arith.constant 0 : index
      %19 = vector.load %arg2[%c0_14, %18, %c0_15] : memref<1x9x256xf32, #tpu.memory_space<vmem>>, vector<1x1x256xf32>
      %20 = vector.shape_cast %19 : vector<1x1x256xf32> to vector<1x256xf32>
      %c0_16 = arith.constant 0 : index
      %21 = arith.index_cast %arg10 : i32 to index
      %c0_17 = arith.constant 0 : index
      %22 = vector.load %arg3[%c0_16, %21, %c0_17] : memref<1x9x256xf32, #tpu.memory_space<vmem>>, vector<1x1x256xf32>
      %23 = vector.shape_cast %22 : vector<1x1x256xf32> to vector<1x256xf32>
      %c0_18 = arith.constant 0 : index
      %24 = arith.index_cast %arg10 : i32 to index
      %c0_19 = arith.constant 0 : index
      %25 = vector.load %arg4[%c0_18, %24, %c0_19] : memref<1x9x256xf32, #tpu.memory_space<vmem>>, vector<1x1x256xf32>
      %26 = vector.shape_cast %25 : vector<1x1x256xf32> to vector<1x256xf32>
      %27 = math.floor %20 : vector<1x256xf32>
      %28 = math.floor %23 : vector<1x256xf32>
      %29 = arith.subf %20, %27 : vector<1x256xf32>
      %30 = arith.subf %23, %28 : vector<1x256xf32>
      %31 = arith.fptosi %27 : vector<1x256xf32> to vector<1x256xi32>
      %32 = arith.fptosi %28 : vector<1x256xf32> to vector<1x256xi32>
      %c0_i32_20 = arith.constant 0 : i32
      %33 = vector.broadcast %c0_i32_20 : i32 to vector<1x256xi32>
      %34 = arith.cmpi sge, %31, %33 : vector<1x256xi32>
      %c16_i32 = arith.constant 16 : i32
      %35 = vector.broadcast %c16_i32 : i32 to vector<1x256xi32>
      %36 = arith.cmpi slt, %31, %35 : vector<1x256xi32>
      %37 = arith.andi %34, %36 : vector<1x256xi1>
      %cst_21 = arith.constant 1.000000e+00 : f32
      %38 = vector.broadcast %cst_21 : f32 to vector<1x256xf32>
      %39 = arith.subf %38, %29 : vector<1x256xf32>
      %cst_22 = arith.constant 0.000000e+00 : f32
      %40 = vector.broadcast %cst_22 : f32 to vector<1x256xf32>
      %41 = arith.select %37, %39, %40 : vector<1x256xi1>, vector<1x256xf32>
      %42 = arith.mulf %41, %26 : vector<1x256xf32>
      %c-1_i32 = arith.constant -1 : i32
      %43 = vector.broadcast %c-1_i32 : i32 to vector<1x256xi32>
      %44 = arith.cmpi sge, %31, %43 : vector<1x256xi32>
      %c15_i32 = arith.constant 15 : i32
      %45 = vector.broadcast %c15_i32 : i32 to vector<1x256xi32>
      %46 = arith.cmpi slt, %31, %45 : vector<1x256xi32>
      %47 = arith.andi %44, %46 : vector<1x256xi1>
      %cst_23 = arith.constant 0.000000e+00 : f32
      %48 = vector.broadcast %cst_23 : f32 to vector<1x256xf32>
      %49 = arith.select %47, %29, %48 : vector<1x256xi1>, vector<1x256xf32>
      %50 = arith.mulf %49, %26 : vector<1x256xf32>
      %c0_i32_24 = arith.constant 0 : i32
      %51 = vector.broadcast %c0_i32_24 : i32 to vector<1x256xi32>
      %52 = arith.cmpi sge, %32, %51 : vector<1x256xi32>
      %c16_i32_25 = arith.constant 16 : i32
      %53 = vector.broadcast %c16_i32_25 : i32 to vector<1x256xi32>
      %54 = arith.cmpi slt, %32, %53 : vector<1x256xi32>
      %55 = arith.andi %52, %54 : vector<1x256xi1>
      %cst_26 = arith.constant 1.000000e+00 : f32
      %56 = vector.broadcast %cst_26 : f32 to vector<1x256xf32>
      %57 = arith.subf %56, %30 : vector<1x256xf32>
      %cst_27 = arith.constant 0.000000e+00 : f32
      %58 = vector.broadcast %cst_27 : f32 to vector<1x256xf32>
      %59 = arith.select %55, %57, %58 : vector<1x256xi1>, vector<1x256xf32>
      %c-1_i32_28 = arith.constant -1 : i32
      %60 = vector.broadcast %c-1_i32_28 : i32 to vector<1x256xi32>
      %61 = arith.cmpi sge, %32, %60 : vector<1x256xi32>
      %c15_i32_29 = arith.constant 15 : i32
      %62 = vector.broadcast %c15_i32_29 : i32 to vector<1x256xi32>
      %63 = arith.cmpi slt, %32, %62 : vector<1x256xi32>
      %64 = arith.andi %61, %63 : vector<1x256xi1>
      %cst_30 = arith.constant 0.000000e+00 : f32
      %65 = vector.broadcast %cst_30 : f32 to vector<1x256xf32>
      %66 = arith.select %64, %30, %65 : vector<1x256xi1>, vector<1x256xf32>
      %67 = vector.broadcast %31 : vector<1x256xi32> to vector<16x256xi32>
      %68 = arith.cmpi eq, %2, %67 : vector<16x256xi32>
      %cst_31 = arith.constant 0.000000e+00 : f32
      %69 = vector.shape_cast %42 : vector<1x256xf32> to vector<1x256xf32>
      %70 = vector.broadcast %69 : vector<1x256xf32> to vector<16x256xf32>
      %71 = vector.broadcast %cst_31 : f32 to vector<16x256xf32>
      %72 = arith.select %68, %70, %71 : vector<16x256xi1>, vector<16x256xf32>
      %c1_i32_32 = arith.constant 1 : i32
      %73 = vector.broadcast %c1_i32_32 : i32 to vector<1x256xi32>
      %74 = arith.addi %31, %73 : vector<1x256xi32>
      %75 = vector.broadcast %74 : vector<1x256xi32> to vector<16x256xi32>
      %76 = arith.cmpi eq, %2, %75 : vector<16x256xi32>
      %cst_33 = arith.constant 0.000000e+00 : f32
      %77 = vector.shape_cast %50 : vector<1x256xf32> to vector<1x256xf32>
      %78 = vector.broadcast %77 : vector<1x256xf32> to vector<16x256xf32>
      %79 = vector.broadcast %cst_33 : f32 to vector<16x256xf32>
      %80 = arith.select %76, %78, %79 : vector<16x256xi1>, vector<16x256xf32>
      %81 = arith.addf %72, %80 : vector<16x256xf32>
      %82 = vector.broadcast %32 : vector<1x256xi32> to vector<16x256xi32>
      %83 = arith.cmpi eq, %3, %82 : vector<16x256xi32>
      %cst_34 = arith.constant 0.000000e+00 : f32
      %84 = vector.shape_cast %59 : vector<1x256xf32> to vector<1x256xf32>
      %85 = vector.broadcast %84 : vector<1x256xf32> to vector<16x256xf32>
      %86 = vector.broadcast %cst_34 : f32 to vector<16x256xf32>
      %87 = arith.select %83, %85, %86 : vector<16x256xi1>, vector<16x256xf32>
      %c1_i32_35 = arith.constant 1 : i32
      %88 = vector.broadcast %c1_i32_35 : i32 to vector<1x256xi32>
      %89 = arith.addi %32, %88 : vector<1x256xi32>
      %90 = vector.broadcast %89 : vector<1x256xi32> to vector<16x256xi32>
      %91 = arith.cmpi eq, %3, %90 : vector<16x256xi32>
      %cst_36 = arith.constant 0.000000e+00 : f32
      %92 = vector.shape_cast %66 : vector<1x256xf32> to vector<1x256xf32>
      %93 = vector.broadcast %92 : vector<1x256xf32> to vector<16x256xf32>
      %94 = vector.broadcast %cst_36 : f32 to vector<16x256xf32>
      %95 = arith.select %91, %93, %94 : vector<16x256xi1>, vector<16x256xf32>
      %96 = arith.addf %87, %95 : vector<16x256xf32>
      %97 = vector.shape_cast %81 : vector<16x256xf32> to vector<16x1x256xf32>
      %98 = vector.shape_cast %96 : vector<16x256xf32> to vector<1x16x256xf32>
      %99 = vector.broadcast %97 : vector<16x1x256xf32> to vector<16x16x256xf32>
      %100 = vector.broadcast %98 : vector<1x16x256xf32> to vector<16x16x256xf32>
      %101 = arith.mulf %99, %100 : vector<16x16x256xf32>
      %102 = vector.shape_cast %101 : vector<16x16x256xf32> to vector<256x256xf32>
      %103 = arith.truncf %102 : vector<256x256xf32> to vector<256x256xbf16>
      %cst_37 = arith.constant dense<0.000000e+00> : vector<16x256xf32>
      %104 = tpu.matmul %1, %103, %cst_37 {dimension_numbers = #tpu.dot_dimension_numbers<[1], [0], [0], [1], [0, 0, 1, 1], [], []>} : vector<16x256xbf16>, vector<256x256xbf16>, vector<16x256xf32> -> vector<16x256xf32>
      %c16_i32_38 = arith.constant 16 : i32
      %105 = arith.muli %arg10, %c16_i32_38 : i32
      %106 = tpu.assume_multiple %105, 16 : i32
      %107 = arith.truncf %104 : vector<16x256xf32> to vector<16x256xbf16>
      %108 = arith.index_cast %106 : i32 to index
      %c0_39 = arith.constant 0 : index
      %109 = vector.load %arg9[%108, %c0_39] : memref<144x256xbf16, #tpu.memory_space<vmem>>, vector<16x256xbf16>
      tpu.vector_store %arg9[%108, %c0_39], %107 {strides = array<i32>} : memref<144x256xbf16, #tpu.memory_space<vmem>>, vector<16x256xbf16>,
    }
    %c9_i32_2 = arith.constant 9 : i32
    %c0_3 = arith.constant 0 : index
    %c0_4 = arith.constant 0 : index
    %5 = vector.load %arg6[%c0_3, %c0_4] : memref<8x144xbf16, #tpu.memory_space<vmem>>, vector<8x144xbf16>
    %c0_5 = arith.constant 0 : index
    %c0_6 = arith.constant 0 : index
    %6 = vector.load %arg9[%c0_5, %c0_6] : memref<144x256xbf16, #tpu.memory_space<vmem>>, vector<144x256xbf16>
    %cst = arith.constant dense<0.000000e+00> : vector<8x256xf32>
    %7 = tpu.matmul %5, %6, %cst {dimension_numbers = #tpu.dot_dimension_numbers<[1], [0], [0], [1], [0, 0, 1, 1], [], []>} : vector<8x144xbf16>, vector<144x256xbf16>, vector<8x256xf32> -> vector<8x256xf32>
    %c0_7 = arith.constant 0 : index
    %c0_8 = arith.constant 0 : index
    %8 = vector.load %arg7[%c0_7, %c0_8] : memref<8x1xf32, #tpu.memory_space<vmem>>, vector<8x1xf32>
    %9 = vector.broadcast %8 : vector<8x1xf32> to vector<8x256xf32>
    %10 = arith.addf %7, %9 : vector<8x256xf32>
    %cst_9 = arith.constant 0.000000e+00 : f32
    %cst_10 = arith.constant 6.000000e+00 : f32
    %11 = vector.broadcast %cst_9 : f32 to vector<8x256xf32>
    %12 = arith.maximumf %11, %10 : vector<8x256xf32>
    %13 = vector.broadcast %cst_10 : f32 to vector<8x256xf32>
    %14 = arith.minimumf %13, %12 : vector<8x256xf32>
    %c0_11 = arith.constant 0 : index
    %c0_12 = arith.constant 0 : index
    %c0_13 = arith.constant 0 : index
    %15 = vector.load %arg8[%c0_11, %c0_12, %c0_13] : memref<1x8x256xf32, #tpu.memory_space<vmem>>, vector<1x8x256xf32>
    %16 = vector.shape_cast %15 : vector<1x8x256xf32> to vector<8x256xf32>
    %17 = vector.shape_cast %14 : vector<8x256xf32> to vector<1x8x256xf32>
    tpu.vector_store %arg8[%c0_11, %c0_12, %c0_13], %17 {strides = array<i32>} : memref<1x8x256xf32, #tpu.memory_space<vmem>>, vector<1x8x256xf32>,
    return
  }
  func.func @transform_0(%arg0: i32, %arg1: i32) -> (i32, i32, i32) {
    %c0_i32 = arith.constant 0 : i32
    %c0_i32_0 = arith.constant 0 : i32
    return %arg0, %c0_i32, %arg1 : i32, i32, i32
  }
  func.func @transform_1(%arg0: i32, %arg1: i32) -> (i32, i32, i32) {
    %c0_i32 = arith.constant 0 : i32
    %c0_i32_0 = arith.constant 0 : i32
    return %arg0, %c0_i32, %arg1 : i32, i32, i32
  }
  func.func @transform_2(%arg0: i32, %arg1: i32) -> (i32, i32, i32) {
    %c0_i32 = arith.constant 0 : i32
    %c0_i32_0 = arith.constant 0 : i32
    return %arg0, %c0_i32, %arg1 : i32, i32, i32
  }
  func.func @transform_3(%arg0: i32, %arg1: i32) -> (i32, i32, i32) {
    %c0_i32 = arith.constant 0 : i32
    %c0_i32_0 = arith.constant 0 : i32
    %c0_i32_1 = arith.constant 0 : i32
    return %arg0, %c0_i32, %c0_i32_0 : i32, i32, i32
  }
  func.func @transform_4(%arg0: i32, %arg1: i32) -> (i32, i32) {
    %c0_i32 = arith.constant 0 : i32
    %c0_i32_0 = arith.constant 0 : i32
    %c0_i32_1 = arith.constant 0 : i32
    return %c0_i32, %c0_i32_0 : i32, i32
  }
  func.func @transform_5(%arg0: i32, %arg1: i32) -> (i32, i32) {
    %c0_i32 = arith.constant 0 : i32
    %c0_i32_0 = arith.constant 0 : i32
    %c0_i32_1 = arith.constant 0 : i32
    return %c0_i32, %c0_i32_0 : i32, i32
  }
  func.func @transform_6(%arg0: i32, %arg1: i32) -> (i32, i32, i32) {
    %c0_i32 = arith.constant 0 : i32
    %c0_i32_0 = arith.constant 0 : i32
    return %arg0, %c0_i32, %arg1 : i32, i32, i32
  }
}

</mosaic_0001>

<llo_original>
// kernel: tpu_custom_call.1
$region0: #{tpu_custom_call.1}
  #allocation0 [shape = 'u32[]', space=smem, size = 0x4, offset = 0x4, fixed_abs, tag = 'smem constant byte address 0x4 - core index']
  #allocation1 [shape = 'u32[144,128]{1,0:T(1,128)}', space=vmem, size = 0x12000, scoped, tag = 'internal scratch']
  #allocation2 [shape = 'bf16[144,256]{1,0:T(16,128)(2,1)}', space=vmem, size = 0x12000, scoped, tag = 'scratch operand']
  %s0 = inlined_call_operand.vmem [shape: f32[2,9,256], index: 0, kind: input, shape index: {}]
  %s1 = inlined_call_operand.vmem [shape: f32[2,9,256], index: 1, kind: input, shape index: {}]
  %s2 = inlined_call_operand.vmem [shape: f32[2,9,256], index: 2, kind: input, shape index: {}]
  %s3 = inlined_call_operand.vmem [shape: bf16[2,16,256], index: 3, kind: input, shape index: {}]
  %s4 = inlined_call_operand.vmem [shape: bf16[8,144], index: 4, kind: input, shape index: {}]
  %s5 = inlined_call_operand.vmem [shape: f32[8,1], index: 5, kind: input, shape index: {}]
  %s6 = inlined_call_operand.hbm [shape: f32[2,8,256], index: 6, kind: output, shape index: {}]
  %s7 = sld [smem:[#allocation0]]
  $region64: #{tpu_custom_call.1} parent=0
    _
  %s9 = ssub.s32 1, %s7
  %s10 = scalar_select 0, %s9, %s7
  $region1: #{tpu_custom_call.1} parent=0
    #allocation3 [shape = 'u8[16384]{0}', space=vmem, size = 0x4000, scoped, tag = 'output window, operand 0']
    #allocation4 [shape = 's32[2]{0}', space=sflag, size = 0x8, scoped, tag = 'scoped memory for tpu_custom_call.1']
    %11 = vsyncpa [#allocation4], 0
    %s12 = scalar_lea.sflag [#allocation4], 1
    %13 = vsyncpa %s12, 0
    loop: start=0, step=1, limit=4
    $region2: #{tpu_custom_call.1} parent=1 // loop_pre_header
      _
    $region3: #{tpu_custom_call.1} parent=1 // loop_header
      %s15 = sphi 0, %s19
      %p16 = scmp.ge.s32.totalorder %s15, 4
      %s22 = sphi 0, %s34
      %s23 = sphi 0, %s30
      %s24 = sphi 0, %s22
      %s25 = sphi 0, %s23
      %s26 = sphi 0, %s24
      %s27 = sphi 0, %s25
      %s39 = sphi 0, %s41
      %s42 = sphi 0, %s39
      %s43 = sphi 0, %s42
      %s59 = sphi 0, %s43
      %s67 = sphi 0, %s69
      %s70 = sphi 0, %s67
      %s71 = sphi 0, %s70
      %s87 = sphi 0, %s71
      %s95 = sphi 0, %s97
      %s98 = sphi 0, %s95
      %s99 = sphi 0, %s98
      %s115 = sphi 0, %s99
      %s121 = sphi 0, %s123
      %s124 = sphi 0, %s121
      %s125 = sphi 0, %s124
      %s141 = sphi 0, %s125
      %s145 = sphi 0, %s145
      %s147 = sphi 0, %s145
      %s148 = sphi 0, %s147
      %s162 = sphi 0, %s148
      %s166 = sphi 0, %s166
      %s168 = sphi 0, %s166
      %s169 = sphi 0, %s168
      %s183 = sphi 0, %s169
      %s191 = sphi 0, %s193
      %s194 = sphi 0, %s191
      %s195 = sphi 0, %s194
      %s211 = sphi 0, %s195
    $region4: #{tpu_custom_call.1} parent=1 // loop_header_branch
      %18 = sbr.rel (%p16) target = $region8
    $region5: #{tpu_custom_call.1} parent=1 // loop_body
      %s20 = ssub.s32 %s15, 1
      %s21 = ssub.s32 %s15, 2
      %s28 = sadd.s32 1, %s23
      %p29 = scmp.ge.s32.totalorder %s28, 1
      %s30 = scalar_select %p29, 0, %s28
      %s31 = sadd.s32 1, %s22
      %s32 = scalar_select %p29, %s31, %s22
      %p33 = scmp.ge.s32.totalorder %s32, 2
      %s34 = scalar_select %p33, 0, %s32
      %s35 = ssub.s32 %s22, %s34
      %s36 = ssub.s32 %s23, %s30
      %s37 = sor.u32 %s35, %s36
      %p38 = scmp.eq.s32.totalorder %s37, 0
      %s40 = sadd.s32 %s39, 1
      %s41 = scalar_select %p38, %s39, %s40
      %p44 = pneg %p38
      %p45 = scmp.eq.s32.totalorder %s15, 1
      %p46 = por %p44, %p45
      %p47 = scmp.ne.s32.totalorder %s39, %s42
      %p48 = scmp.eq.s32.totalorder %s15, 0
      %p49 = por %p47, %p48
      %p50 = scmp.ne.s32.totalorder %s39, %s42
      %p51 = scmp.eq.s32.totalorder %s20, 1
      %p52 = por %p50, %p51
      %p53 = scmp.ne.s32.totalorder %s42, %s43
      %p54 = scmp.eq.s32.totalorder %s20, 0
      %p55 = por %p53, %p54
      %p56 = scmp.ne.s32.totalorder %s42, %s43
      %p57 = scmp.eq.s32.totalorder %s21, 1
      %p58 = por %p56, %p57
      %p60 = scmp.ne.s32.totalorder %s43, %s59
      %p61 = scmp.eq.s32.totalorder %s21, 0
      %p62 = por %p60, %p61
      %s63 = ssub.s32 %s22, %s34
      %s64 = ssub.s32 %s23, %s30
      %s65 = sor.u32 %s63, %s64
      %p66 = scmp.eq.s32.totalorder %s65, 0
      %s68 = sadd.s32 %s67, 1
      %s69 = scalar_select %p66, %s67, %s68
      %p72 = pneg %p66
      %p73 = scmp.eq.s32.totalorder %s15, 1
      %p74 = por %p72, %p73
      %p75 = scmp.ne.s32.totalorder %s67, %s70
      %p76 = scmp.eq.s32.totalorder %s15, 0
      %p77 = por %p75, %p76
      %p78 = scmp.ne.s32.totalorder %s67, %s70
      %p79 = scmp.eq.s32.totalorder %s20, 1
      %p80 = por %p78, %p79
      %p81 = scmp.ne.s32.totalorder %s70, %s71
      %p82 = scmp.eq.s32.totalorder %s20, 0
      %p83 = por %p81, %p82
      %p84 = scmp.ne.s32.totalorder %s70, %s71
      %p85 = scmp.eq.s32.totalorder %s21, 1
      %p86 = por %p84, %p85
      %p88 = scmp.ne.s32.totalorder %s71, %s87
      %p89 = scmp.eq.s32.totalorder %s21, 0
      %p90 = por %p88, %p89
      %s91 = ssub.s32 %s22, %s34
      %s92 = ssub.s32 %s23, %s30
      %s93 = sor.u32 %s91, %s92
      %p94 = scmp.eq.s32.totalorder %s93, 0
      %s96 = sadd.s32 %s95, 1
      %s97 = scalar_select %p94, %s95, %s96
      %p100 = pneg %p94
      %p101 = scmp.eq.s32.totalorder %s15, 1
      %p102 = por %p100, %p101
      %p103 = scmp.ne.s32.totalorder %s95, %s98
      %p104 = scmp.eq.s32.totalorder %s15, 0
      %p105 = por %p103, %p104
      %p106 = scmp.ne.s32.totalorder %s95, %s98
      %p107 = scmp.eq.s32.totalorder %s20, 1
      %p108 = por %p106, %p107
      %p109 = scmp.ne.s32.totalorder %s98, %s99
      %p110 = scmp.eq.s32.totalorder %s20, 0
      %p111 = por %p109, %p110
      %p112 = scmp.ne.s32.totalorder %s98, %s99
      %p113 = scmp.eq.s32.totalorder %s21, 1
      %p114 = por %p112, %p113
      %p116 = scmp.ne.s32.totalorder %s99, %s115
      %p117 = scmp.eq.s32.totalorder %s21, 0
      %p118 = por %p116, %p117
      %s119 = ssub.s32 %s22, %s34
      %p120 = scmp.eq.s32.totalorder %s119, 0
      %s122 = sadd.s32 %s121, 1
      %s123 = scalar_select %p120, %s121, %s122
      %p126 = pneg %p120
      %p127 = scmp.eq.s32.totalorder %s15, 1
      %p128 = por %p126, %p127
      %p129 = scmp.ne.s32.totalorder %s121, %s124
      %p130 = scmp.eq.s32.totalorder %s15, 0
      %p131 = por %p129, %p130
      %p132 = scmp.ne.s32.totalorder %s121, %s124
      %p133 = scmp.eq.s32.totalorder %s20, 1
      %p134 = por %p132, %p133
      %p135 = scmp.ne.s32.totalorder %s124, %s125
      %p136 = scmp.eq.s32.totalorder %s20, 0
      %p137 = por %p135, %p136
      %p138 = scmp.ne.s32.totalorder %s124, %s125
      %p139 = scmp.eq.s32.totalorder %s21, 1
      %p140 = por %p138, %p139
      %p142 = scmp.ne.s32.totalorder %s125, %s141
      %p143 = scmp.eq.s32.totalorder %s21, 0
      %p144 = por %p142, %p143
      %s146 = sadd.s32 %s145, 1
      %p149 = scmp.eq.s32.totalorder %s15, 1
      %p150 = scmp.ne.s32.totalorder %s145, %s147
      %p151 = scmp.eq.s32.totalorder %s15, 0
      %p152 = por %p150, %p151
      %p153 = scmp.ne.s32.totalorder %s145, %s147
      %p154 = scmp.eq.s32.totalorder %s20, 1
      %p155 = por %p153, %p154
      %p156 = scmp.ne.s32.totalorder %s147, %s148
      %p157 = scmp.eq.s32.totalorder %s20, 0
      %p158 = por %p156, %p157
      %p159 = scmp.ne.s32.totalorder %s147, %s148
      %p160 = scmp.eq.s32.totalorder %s21, 1
      %p161 = por %p159, %p160
      %p163 = scmp.ne.s32.totalorder %s148, %s162
      %p164 = scmp.eq.s32.totalorder %s21, 0
      %p165 = por %p163, %p164
      %s167 = sadd.s32 %s166, 1
      %p170 = scmp.eq.s32.totalorder %s15, 1
      %p171 = scmp.ne.s32.totalorder %s166, %s168
      %p172 = scmp.eq.s32.totalorder %s15, 0
      %p173 = por %p171, %p172
      %p174 = scmp.ne.s32.totalorder %s166, %s168
      %p175 = scmp.eq.s32.totalorder %s20, 1
      %p176 = por %p174, %p175
      %p177 = scmp.ne.s32.totalorder %s168, %s169
      %p178 = scmp.eq.s32.totalorder %s20, 0
      %p179 = por %p177, %p178
      %p180 = scmp.ne.s32.totalorder %s168, %s169
      %p181 = scmp.eq.s32.totalorder %s21, 1
      %p182 = por %p180, %p181
      %p184 = scmp.ne.s32.totalorder %s169, %s183
      %p185 = scmp.eq.s32.totalorder %s21, 0
      %p186 = por %p184, %p185
      %s187 = ssub.s32 %s22, %s34
      %s188 = ssub.s32 %s23, %s30
      %s189 = sor.u32 %s187, %s188
      %p190 = scmp.eq.s32.totalorder %s189, 0
      %s192 = sadd.s32 %s191, 1
      %s193 = scalar_select %p190, %s191, %s192
      %p196 = pneg %p190
      %p197 = scmp.eq.s32.totalorder %s15, 1
      %p198 = por %p196, %p197
      %p199 = scmp.ne.s32.totalorder %s191, %s194
      %p200 = scmp.eq.s32.totalorder %s15, 0
      %p201 = por %p199, %p200
      %p202 = scmp.ne.s32.totalorder %s191, %s194
      %p203 = scmp.eq.s32.totalorder %s20, 1
      %p204 = por %p202, %p203
      %p205 = scmp.ne.s32.totalorder %s194, %s195
      %p206 = scmp.eq.s32.totalorder %s20, 0
      %p207 = por %p205, %p206
      %p208 = scmp.ne.s32.totalorder %s194, %s195
      %p209 = scmp.eq.s32.totalorder %s21, 1
      %p210 = por %p208, %p209
      %p212 = scmp.ne.s32.totalorder %s195, %s211
      %p213 = scmp.eq.s32.totalorder %s21, 0
      %p214 = por %p212, %p213
      %p215 = scmp.le.s32.totalorder 1, %s15
      %p216 = scmp.lt.s32.totalorder %s15, 3
      %p217 = pnand %p215, %p216
      %p218 = pneg %p217
      // Predicated region
      $region9: #{tpu_custom_call.1} parent=5 // pred_check
        _
      $region10: #{tpu_custom_call.1} parent=5 // pred_check_branch
        %220 = sbr.rel (%p217) target = $region12
      $region11: #{tpu_custom_call.1} parent=5 // pred_region
        %s221 = ssub.s32 %s15, 1
        // Predicated region
        $region13: #{tpu_custom_call.1} parent=11 // pred_check
          %p222 = pneg %p158
        $region14: #{tpu_custom_call.1} parent=11 // pred_check_branch
          %224 = sbr.rel (%p222) target = $region16
        $region15: #{tpu_custom_call.1} parent=11 // pred_region
          _
        $region16: #{tpu_custom_call.1} parent=11 // pred_fallthru
          _
        // Predicated region
        $region17: #{tpu_custom_call.1} parent=11 // pred_check
          %p225 = pneg %p179
        $region18: #{tpu_custom_call.1} parent=11 // pred_check_branch
          %227 = sbr.rel (%p225) target = $region20
        $region19: #{tpu_custom_call.1} parent=11 // pred_region
          _
        $region20: #{tpu_custom_call.1} parent=11 // pred_fallthru
          _
      $region12: #{tpu_custom_call.1} parent=5 // pred_fallthru
        _
      %p228 = scmp.lt.s32.totalorder %s15, 2
      // Predicated region
      $region21: #{tpu_custom_call.1} parent=5 // pred_check
        %p229 = pneg %p228
      $region22: #{tpu_custom_call.1} parent=5 // pred_check_branch
        %231 = sbr.rel (%p229) target = $region24
      $region23: #{tpu_custom_call.1} parent=5 // pred_region
        // Predicated region
        $region25: #{tpu_custom_call.1} parent=23 // pred_check
          %p232 = pneg %p49
        $region26: #{tpu_custom_call.1} parent=23 // pred_check_branch
          %234 = sbr.rel (%p232) target = $region28
        $region27: #{tpu_custom_call.1} parent=23 // pred_region
          %s235 = smul.u32 2, %s23
          %p236 = scmp.lt.s32.totalorder %s22, 1
          %s237 = scalar_select %p236, %s22, 1
          %p238 = scmp.lt.s32.totalorder %s235, 1
          %s239 = scalar_select %p238, %s235, 1
          %s240 = smul.addr %s237, 4
          %s241 = sadd.s32 %s239, %s240
          %s242 = smul.addr %s241, 8
          %s243 = scalar_lea.vmem %s0, %s242
          %s244 = smul.u32 2, %s23
        $region28: #{tpu_custom_call.1} parent=23 // pred_fallthru
          _
        // Predicated region
        $region29: #{tpu_custom_call.1} parent=23 // pred_check
          %p245 = pneg %p77
        $region30: #{tpu_custom_call.1} parent=23 // pred_check_branch
          %247 = sbr.rel (%p245) target = $region32
        $region31: #{tpu_custom_call.1} parent=23 // pred_region
          %s248 = smul.u32 2, %s23
          %p249 = scmp.lt.s32.totalorder %s22, 1
          %s250 = scalar_select %p249, %s22, 1
          %p251 = scmp.lt.s32.totalorder %s248, 1
          %s252 = scalar_select %p251, %s248, 1
          %s253 = smul.addr %s250, 4
          %s254 = sadd.s32 %s252, %s253
          %s255 = smul.addr %s254, 8
          %s256 = scalar_lea.vmem %s1, %s255
          %s257 = smul.u32 2, %s23
        $region32: #{tpu_custom_call.1} parent=23 // pred_fallthru
          _
        // Predicated region
        $region33: #{tpu_custom_call.1} parent=23 // pred_check
          %p258 = pneg %p105
        $region34: #{tpu_custom_call.1} parent=23 // pred_check_branch
          %260 = sbr.rel (%p258) target = $region36
        $region35: #{tpu_custom_call.1} parent=23 // pred_region
          %s261 = smul.u32 2, %s23
          %p262 = scmp.lt.s32.totalorder %s22, 1
          %s263 = scalar_select %p262, %s22, 1
          %p264 = scmp.lt.s32.totalorder %s261, 1
          %s265 = scalar_select %p264, %s261, 1
          %s266 = smul.addr %s263, 4
          %s267 = sadd.s32 %s265, %s266
          %s268 = smul.addr %s267, 8
          %s269 = scalar_lea.vmem %s2, %s268
          %s270 = smul.u32 2, %s23
        $region36: #{tpu_custom_call.1} parent=23 // pred_fallthru
          _
        // Predicated region
        $region37: #{tpu_custom_call.1} parent=23 // pred_check
          %p271 = pneg %p131
        $region38: #{tpu_custom_call.1} parent=23 // pred_check_branch
          %273 = sbr.rel (%p271) target = $region40
        $region39: #{tpu_custom_call.1} parent=23 // pred_region
          %p274 = scmp.lt.s32.totalorder %s22, 1
          %s275 = scalar_select %p274, %s22, 1
          %s276 = smul.addr %s275, 4
          %s277 = smul.addr %s276, 4
          %s278 = scalar_lea.vmem %s3, %s277
        $region40: #{tpu_custom_call.1} parent=23 // pred_fallthru
          _
      $region24: #{tpu_custom_call.1} parent=5 // pred_fallthru
        _
      %p279 = scmp.le.s32.totalorder 1, %s15
      %p280 = scmp.lt.s32.totalorder %s15, 3
      %p281 = pnand %p279, %p280
      %p282 = pneg %p281
      // Predicated region
      $region41: #{tpu_custom_call.1} parent=5 // pred_check
        _
      $region42: #{tpu_custom_call.1} parent=5 // pred_check_branch
        %284 = sbr.rel (%p281) target = $region44
      $region43: #{tpu_custom_call.1} parent=5 // pred_region
        %s285 = ssub.s32 %s15, 1
        %s286 = smul.u32 2, %s25
        %p287 = scmp.lt.s32.totalorder %s24, 1
        %s288 = scalar_select %p287, %s24, 1
        %p289 = scmp.lt.s32.totalorder %s286, 1
        %s290 = scalar_select %p289, %s286, 1
        %s291 = smul.addr %s288, 4
        %s292 = sadd.s32 %s290, %s291
        %s293 = smul.addr %s292, 8
        %s294 = scalar_lea.vmem %s0, %s293
        %p295 = pneg %p55
        %p296 = pneg %p52
        %s297 = smul.u32 2, %s25
        %p298 = scmp.lt.s32.totalorder %s24, 1
        %s299 = scalar_select %p298, %s24, 1
        %p300 = scmp.lt.s32.totalorder %s297, 1
        %s301 = scalar_select %p300, %s297, 1
        %s302 = smul.addr %s299, 4
        %s303 = sadd.s32 %s301, %s302
        %s304 = smul.addr %s303, 8
        %s305 = scalar_lea.vmem %s1, %s304
        %p306 = pneg %p83
        %p307 = pneg %p80
        %s308 = smul.u32 2, %s25
        %p309 = scmp.lt.s32.totalorder %s24, 1
        %s310 = scalar_select %p309, %s24, 1
        %p311 = scmp.lt.s32.totalorder %s308, 1
        %s312 = scalar_select %p311, %s308, 1
        %s313 = smul.addr %s310, 4
        %s314 = sadd.s32 %s312, %s313
        %s315 = smul.addr %s314, 8
        %s316 = scalar_lea.vmem %s2, %s315
        %p317 = pneg %p111
        %p318 = pneg %p108
        %p319 = scmp.lt.s32.totalorder %s24, 1
        %s320 = scalar_select %p319, %s24, 1
        %s321 = smul.addr %s320, 4
        %s322 = smul.addr %s321, 4
        %s323 = scalar_lea.vmem %s3, %s322
        %p324 = pneg %p137
        %p325 = pneg %p134
        %p326 = pneg %p158
        %p327 = pneg %p155
        %p328 = pneg %p179
        %p329 = pneg %p176
        %p330 = pneg %p207
        %p331 = pneg %p204
        %s332 = sand.u32 %s194, 1
        %s333 = scalar_lea.sflag [#allocation4], %s332
        %s334 = sand.u32 %s194, 1
        %s335 = smul.addr %s334, 16
        %s336 = scalar_lea.vmem [#allocation3], %s335
        %s337 = smul.u32 2, %s25
        %p338 = scmp.lt.s32.totalorder %s24, 1
        %s339 = scalar_select %p338, %s24, 1
        %p340 = scmp.lt.s32.totalorder %s337, 1
        %s341 = scalar_select %p340, %s337, 1
        %s342 = smul.addr %s339, 4
        %s343 = sadd.s32 %s341, %s342
        %s344 = smul.addr %s343, 8
        %s345 = scalar_lea.vmem %s0, %s344
        %s346 = smul.u32 2, %s25
        %s347 = smul.u32 2, %s25
        %p348 = scmp.lt.s32.totalorder %s24, 1
        %s349 = scalar_select %p348, %s24, 1
        %p350 = scmp.lt.s32.totalorder %s347, 1
        %s351 = scalar_select %p350, %s347, 1
        %s352 = smul.addr %s349, 4
        %s353 = sadd.s32 %s351, %s352
        %s354 = smul.addr %s353, 8
        %s355 = scalar_lea.vmem %s1, %s354
        %s356 = smul.u32 2, %s25
        %s357 = smul.u32 2, %s25
        %p358 = scmp.lt.s32.totalorder %s24, 1
        %s359 = scalar_select %p358, %s24, 1
        %p360 = scmp.lt.s32.totalorder %s357, 1
        %s361 = scalar_select %p360, %s357, 1
        %s362 = smul.addr %s359, 4
        %s363 = sadd.s32 %s361, %s362
        %s364 = smul.addr %s363, 8
        %s365 = scalar_lea.vmem %s2, %s364
        %s366 = smul.u32 2, %s25
        %p367 = scmp.lt.s32.totalorder %s24, 1
        %s368 = scalar_select %p367, %s24, 1
        %s369 = smul.addr %s368, 4
        %s370 = smul.addr %s369, 4
        %s371 = scalar_lea.vmem %s3, %s370
        %s372 = smul.u32 2, %s25
        %v374 = vld [vmem:[%s371] sm:$0xff]
        %v375 = vld [vmem:[%s371 + $0x8] sm:$0xff]
        %v376 = vlaneseq
        %v377 = vshrl.u32 %v376, 7
        %v378 = vadd.s32 %v377, 8
        loop: start=0, step=1, limit=9
        $region45: #{tpu_custom_call.1} parent=43 // loop_pre_header
          _
        $region46: #{tpu_custom_call.1} parent=43 // loop_header
          %s380 = sphi 0, %s384
          %p381 = scmp.ge.s32.totalorder %s380, 9
        $region47: #{tpu_custom_call.1} parent=43 // loop_header_branch
          %383 = sbr.rel (%p381) target = $region51
        $region48: #{tpu_custom_call.1} parent=43 // loop_body
          %s385 = sshra.s32 %s380, 3
          %s386 = sand.u32 %s380, 7
          %s387 = sshra.s32 %s380, 3
          %s388 = sand.u32 %s380, 7
          %s389 = smul.u32 %s385, 2
          %s390 = smul.u32 %s389, 8
          %s391 = sadd.s32 %s390, %s388
          %s392 = scalar_lea.vmem %s345, %s391
          %v393 = vld [vmem:[%s392] ss:$8 sm:$0x3]
          %s394 = scalar_lea.vmem %s355, %s391
          %v395 = vld [vmem:[%s394] ss:$8 sm:$0x3]
          %s396 = scalar_lea.vmem %s365, %s391
          %v397 = vld [vmem:[%s396] ss:$8 sm:$0x3]
          %v398 = vfloor.f32 %v393
          %v399 = vfloor.f32 %v395
          %v400 = vsub.f32 %v393, %v398
          %v401 = vsub.f32 %v395, %v399
          %v402 = vcvt.f32.s32.to.zero.pseudo %v398
          %v403 = vcvt.f32.s32.to.zero.pseudo %v399
          %vm404 = vcmp.ge.s32.totalorder %v402, 0
          %vm405 = vcmp.lt.s32.totalorder %v402, 16
          %vm406 = vmand %vm404, %vm405
          %v407 = vsub.f32 1.0, %v400
          %v408 = vsel %vm406, %v407, 0.0
          %v409 = vmul.f32 %v408, %v397
          %vm410 = vcmp.ge.s32.totalorder %v402, 4294967295
          %vm411 = vcmp.lt.s32.totalorder %v402, 15
          %vm412 = vmand %vm410, %vm411
          %v413 = vsel %vm412, %v400, 0.0
          %v414 = vmul.f32 %v413, %v397
          %vm415 = vcmp.ge.s32.totalorder %v403, 0
          %vm416 = vcmp.lt.s32.totalorder %v403, 16
          %vm417 = vmand %vm415, %vm416
          %v418 = vsub.f32 1.0, %v401
          %v419 = vsel %vm417, %v418, 0.0
          %vm420 = vcmp.ge.s32.totalorder %v403, 4294967295
          %vm421 = vcmp.lt.s32.totalorder %v403, 15
          %vm422 = vmand %vm420, %vm421
          %v423 = vsel %vm422, %v401, 0.0
          %v424 = vlaneseq
          %v425 = vshrl.u32 %v424, 7
          %v426 = vsub.s32 0, %v425
          %v427 = vrot.slane %v402, %v426
          %v428 = vlaneseq
          %v429 = vshrl.u32 %v428, 7
          %v430 = vsub.s32 1, %v429
          %v431 = vrot.slane %v402, %v430
          %vm432 = vcmp.eq.s32.totalorder %v377, %v427
          %vm433 = vcmp.eq.s32.totalorder %v377, %v431
          %vm434 = vcmp.eq.s32.totalorder %v378, %v427
          %vm435 = vcmp.eq.s32.totalorder %v378, %v431
          %v437 = vlaneseq
          %v438 = vshrl.u32 %v437, 7
          %v439 = vsub.s32 0, %v438
          %v440 = vrot.slane %v409, %v439
          %v441 = vlaneseq
          %v442 = vshrl.u32 %v441, 7
          %v443 = vsub.s32 1, %v442
          %v444 = vrot.slane %v409, %v443
          %v447 = vsel %vm432, %v440, 0.0
          %v448 = vsel %vm433, %v444, 0.0
          %v449 = vsel %vm434, %v440, 0.0
          %v450 = vsel %vm435, %v444, 0.0
          %v451 = vadd.s32 %v402, 1
          %v452 = vlaneseq
          %v453 = vshrl.u32 %v452, 7
          %v454 = vsub.s32 0, %v453
          %v455 = vrot.slane %v451, %v454
          %v456 = vlaneseq
          %v457 = vshrl.u32 %v456, 7
          %v458 = vsub.s32 1, %v457
          %v459 = vrot.slane %v451, %v458
          %vm460 = vcmp.eq.s32.totalorder %v377, %v455
          %vm461 = vcmp.eq.s32.totalorder %v377, %v459
          %vm462 = vcmp.eq.s32.totalorder %v378, %v455
          %vm463 = vcmp.eq.s32.totalorder %v378, %v459
          %v465 = vlaneseq
          %v466 = vshrl.u32 %v465, 7
          %v467 = vsub.s32 0, %v466
          %v468 = vrot.slane %v414, %v467
          %v469 = vlaneseq
          %v470 = vshrl.u32 %v469, 7
          %v471 = vsub.s32 1, %v470
          %v472 = vrot.slane %v414, %v471
          %v475 = vsel %vm460, %v468, 0.0
          %v476 = vsel %vm461, %v472, 0.0
          %v477 = vsel %vm462, %v468, 0.0
          %v478 = vsel %vm463, %v472, 0.0
          %v479 = vadd.f32 %v447, %v475
          %v480 = vadd.f32 %v448, %v476
          %v481 = vadd.f32 %v449, %v477
          %v482 = vadd.f32 %v450, %v478
          %v483 = vlaneseq
          %v484 = vshrl.u32 %v483, 7
          %v485 = vsub.s32 0, %v484
          %v486 = vrot.slane %v403, %v485
          %v487 = vlaneseq
          %v488 = vshrl.u32 %v487, 7
          %v489 = vsub.s32 1, %v488
          %v490 = vrot.slane %v403, %v489
          %vm491 = vcmp.eq.s32.totalorder %v377, %v486
          %vm492 = vcmp.eq.s32.totalorder %v377, %v490
          %vm493 = vcmp.eq.s32.totalorder %v378, %v486
          %vm494 = vcmp.eq.s32.totalorder %v378, %v490
          %v496 = vlaneseq
          %v497 = vshrl.u32 %v496, 7
          %v498 = vsub.s32 0, %v497
          %v499 = vrot.slane %v419, %v498
          %v500 = vlaneseq
          %v501 = vshrl.u32 %v500, 7
          %v502 = vsub.s32 1, %v501
          %v503 = vrot.slane %v419, %v502
          %v506 = vsel %vm491, %v499, 0.0
          %v507 = vsel %vm492, %v503, 0.0
          %v508 = vsel %vm493, %v499, 0.0
          %v509 = vsel %vm494, %v503, 0.0
          %v510 = vadd.s32 %v403, 1
          %v511 = vlaneseq
          %v512 = vshrl.u32 %v511, 7
          %v513 = vsub.s32 0, %v512
          %v514 = vrot.slane %v510, %v513
          %v515 = vlaneseq
          %v516 = vshrl.u32 %v515, 7
          %v517 = vsub.s32 1, %v516
          %v518 = vrot.slane %v510, %v517
          %vm519 = vcmp.eq.s32.totalorder %v377, %v514
          %vm520 = vcmp.eq.s32.totalorder %v377, %v518
          %vm521 = vcmp.eq.s32.totalorder %v378, %v514
          %vm522 = vcmp.eq.s32.totalorder %v378, %v518
          %v524 = vlaneseq
          %v525 = vshrl.u32 %v524, 7
          %v526 = vsub.s32 0, %v525
          %v527 = vrot.slane %v423, %v526
          %v528 = vlaneseq
          %v529 = vshrl.u32 %v528, 7
          %v530 = vsub.s32 1, %v529
          %v531 = vrot.slane %v423, %v530
          %v534 = vsel %vm519, %v527, 0.0
          %v535 = vsel %vm520, %v531, 0.0
          %v536 = vsel %vm521, %v527, 0.0
          %v537 = vsel %vm522, %v531, 0.0
          %v538 = vadd.f32 %v506, %v534
          %v539 = vadd.f32 %v507, %v535
          %v540 = vadd.f32 %v508, %v536
          %v541 = vadd.f32 %v509, %v537
          %v546 = vcombine.low %v479, %v480
          %v547 = vcombine.high %v479, %v480
          %v549 = vunpack.c.l.s4 1966171168
          %v550 = vunpack.c.0.s8 %v549
          %v551 = vlaneseq
          %v552 = vshrl.u32 %v551, 7
          %v553 = vsub.s32 %v550, %v552
          %v554 = vrot.slane %v546, %v553
          %v556 = vunpack.c.l.s4 1966171168
          %v557 = vunpack.c.0.s8 %v556
          %v558 = vlaneseq
          %v559 = vshrl.u32 %v558, 7
          %v560 = vsub.s32 %v557, %v559
          %v561 = vrot.slane %v547, %v560
          %v562 = vcombine.high %v554, %v554
          %v563 = vcombine.high %v561, %v561
          %v565 = vunpack.c.l.s4 1966171168
          %v566 = vunpack.c.0.s8 %v565
          %v567 = vlaneseq
          %v568 = vshrl.u32 %v567, 7
          %v569 = vsub.s32 %v566, %v568
          %v570 = vrot.slane %v554, %v569
          %v572 = vunpack.c.l.s4 1966171168
          %v573 = vunpack.c.0.s8 %v572
          %v574 = vlaneseq
          %v575 = vshrl.u32 %v574, 7
          %v576 = vsub.s32 %v573, %v575
          %v577 = vrot.slane %v561, %v576
          %v579 = vunpack.c.l.s4 1966171168
          %v580 = vunpack.c.0.s8 %v579
          %v581 = vlaneseq
          %v582 = vshrl.u32 %v581, 7
          %v583 = vsub.s32 %v580, %v582
          %v584 = vrot.slane %v562, %v583
          %v586 = vunpack.c.l.s4 1966171168
          %v587 = vunpack.c.0.s8 %v586
          %v588 = vlaneseq
          %v589 = vshrl.u32 %v588, 7
          %v590 = vsub.s32 %v587, %v589
          %v591 = vrot.slane %v563, %v590
          %v592 = vcombine.high %v570, %v570
          %v593 = vcombine.high %v577, %v577
          %v594 = vcombine.high %v584, %v584
          %v595 = vcombine.high %v591, %v591
          %v596 = vcombine.low %v481, %v482
          %v597 = vcombine.high %v481, %v482
          %v599 = vunpack.c.l.s4 1966171168
          %v600 = vunpack.c.0.s8 %v599
          %v601 = vlaneseq
          %v602 = vshrl.u32 %v601, 7
          %v603 = vsub.s32 %v600, %v602
          %v604 = vrot.slane %v596, %v603
          %v606 = vunpack.c.l.s4 1966171168
          %v607 = vunpack.c.0.s8 %v606
          %v608 = vlaneseq
          %v609 = vshrl.u32 %v608, 7
          %v610 = vsub.s32 %v607, %v609
          %v611 = vrot.slane %v597, %v610
          %v612 = vcombine.high %v604, %v604
          %v613 = vcombine.high %v611, %v611
          %v615 = vunpack.c.l.s4 1966171168
          %v616 = vunpack.c.0.s8 %v615
          %v617 = vlaneseq
          %v618 = vshrl.u32 %v617, 7
          %v619 = vsub.s32 %v616, %v618
          %v620 = vrot.slane %v604, %v619
          %v622 = vunpack.c.l.s4 1966171168
          %v623 = vunpack.c.0.s8 %v622
          %v624 = vlaneseq
          %v625 = vshrl.u32 %v624, 7
          %v626 = vsub.s32 %v623, %v625
          %v627 = vrot.slane %v611, %v626
          %v629 = vunpack.c.l.s4 1966171168
          %v630 = vunpack.c.0.s8 %v629
          %v631 = vlaneseq
          %v632 = vshrl.u32 %v631, 7
          %v633 = vsub.s32 %v630, %v632
          %v634 = vrot.slane %v612, %v633
          %v636 = vunpack.c.l.s4 1966171168
          %v637 = vunpack.c.0.s8 %v636
          %v638 = vlaneseq
          %v639 = vshrl.u32 %v638, 7
          %v640 = vsub.s32 %v637, %v639
          %v641 = vrot.slane %v613, %v640
          %v642 = vcombine.high %v620, %v620
          %v643 = vcombine.high %v627, %v627
          %v644 = vcombine.high %v634, %v634
          %v645 = vcombine.high %v641, %v641
          %v646 = vlaneseq
          %v647 = vshrl.u32 %v646, 7
          %v648 = vsub.s32 0, %v647
          %v649 = vrot.slane %v570, %v648
          %v650 = vlaneseq
          %v651 = vshrl.u32 %v650, 7
          %v652 = vsub.s32 1, %v651
          %v653 = vrot.slane %v570, %v652
          %v654 = vlaneseq
          %v655 = vshrl.u32 %v654, 7
          %v656 = vsub.s32 0, %v655
          %v657 = vrot.slane %v584, %v656
          %v658 = vlaneseq
          %v659 = vshrl.u32 %v658, 7
          %v660 = vsub.s32 1, %v659
          %v661 = vrot.slane %v584, %v660
          %v662 = vlaneseq
          %v663 = vshrl.u32 %v662, 7
          %v664 = vsub.s32 0, %v663
          %v665 = vrot.slane %v592, %v664
          %v666 = vlaneseq
          %v667 = vshrl.u32 %v666, 7
          %v668 = vsub.s32 1, %v667
          %v669 = vrot.slane %v592, %v668
          %v670 = vlaneseq
          %v671 = vshrl.u32 %v670, 7
          %v672 = vsub.s32 0, %v671
          %v673 = vrot.slane %v594, %v672
          %v674 = vlaneseq
          %v675 = vshrl.u32 %v674, 7
          %v676 = vsub.s32 1, %v675
          %v677 = vrot.slane %v594, %v676
          %v678 = vlaneseq
          %v679 = vshrl.u32 %v678, 7
          %v680 = vsub.s32 0, %v679
          %v681 = vrot.slane %v577, %v680
          %v682 = vlaneseq
          %v683 = vshrl.u32 %v682, 7
          %v684 = vsub.s32 1, %v683
          %v685 = vrot.slane %v577, %v684
          %v686 = vlaneseq
          %v687 = vshrl.u32 %v686, 7
          %v688 = vsub.s32 0, %v687
          %v689 = vrot.slane %v591, %v688
          %v690 = vlaneseq
          %v691 = vshrl.u32 %v690, 7
          %v692 = vsub.s32 1, %v691
          %v693 = vrot.slane %v591, %v692
          %v694 = vlaneseq
          %v695 = vshrl.u32 %v694, 7
          %v696 = vsub.s32 0, %v695
          %v697 = vrot.slane %v593, %v696
          %v698 = vlaneseq
          %v699 = vshrl.u32 %v698, 7
          %v700 = vsub.s32 1, %v699
          %v701 = vrot.slane %v593, %v700
          %v702 = vlaneseq
          %v703 = vshrl.u32 %v702, 7
          %v704 = vsub.s32 0, %v703
          %v705 = vrot.slane %v595, %v704
          %v706 = vlaneseq
          %v707 = vshrl.u32 %v706, 7
          %v708 = vsub.s32 1, %v707
          %v709 = vrot.slane %v595, %v708
          %v710 = vlaneseq
          %v711 = vshrl.u32 %v710, 7
          %v712 = vsub.s32 0, %v711
          %v713 = vrot.slane %v620, %v712
          %v714 = vlaneseq
          %v715 = vshrl.u32 %v714, 7
          %v716 = vsub.s32 1, %v715
          %v717 = vrot.slane %v620, %v716
          %v718 = vlaneseq
          %v719 = vshrl.u32 %v718, 7
          %v720 = vsub.s32 0, %v719
          %v721 = vrot.slane %v634, %v720
          %v722 = vlaneseq
          %v723 = vshrl.u32 %v722, 7
          %v724 = vsub.s32 1, %v723
          %v725 = vrot.slane %v634, %v724
          %v726 = vlaneseq
          %v727 = vshrl.u32 %v726, 7
          %v728 = vsub.s32 0, %v727
          %v729 = vrot.slane %v642, %v728
          %v730 = vlaneseq
          %v731 = vshrl.u32 %v730, 7
          %v732 = vsub.s32 1, %v731
          %v733 = vrot.slane %v642, %v732
          %v734 = vlaneseq
          %v735 = vshrl.u32 %v734, 7
          %v736 = vsub.s32 0, %v735
          %v737 = vrot.slane %v644, %v736
          %v738 = vlaneseq
          %v739 = vshrl.u32 %v738, 7
          %v740 = vsub.s32 1, %v739
          %v741 = vrot.slane %v644, %v740
          %v742 = vlaneseq
          %v743 = vshrl.u32 %v742, 7
          %v744 = vsub.s32 0, %v743
          %v745 = vrot.slane %v627, %v744
          %v746 = vlaneseq
          %v747 = vshrl.u32 %v746, 7
          %v748 = vsub.s32 1, %v747
          %v749 = vrot.slane %v627, %v748
          %v750 = vlaneseq
          %v751 = vshrl.u32 %v750, 7
          %v752 = vsub.s32 0, %v751
          %v753 = vrot.slane %v641, %v752
          %v754 = vlaneseq
          %v755 = vshrl.u32 %v754, 7
          %v756 = vsub.s32 1, %v755
          %v757 = vrot.slane %v641, %v756
          %v758 = vlaneseq
          %v759 = vshrl.u32 %v758, 7
          %v760 = vsub.s32 0, %v759
          %v761 = vrot.slane %v643, %v760
          %v762 = vlaneseq
          %v763 = vshrl.u32 %v762, 7
          %v764 = vsub.s32 1, %v763
          %v765 = vrot.slane %v643, %v764
          %v766 = vlaneseq
          %v767 = vshrl.u32 %v766, 7
          %v768 = vsub.s32 0, %v767
          %v769 = vrot.slane %v645, %v768
          %v770 = vlaneseq
          %v771 = vshrl.u32 %v770, 7
          %v772 = vsub.s32 1, %v771
          %v773 = vrot.slane %v645, %v772
          %v806 = vmul.f32 %v649, %v538
          %v807 = vmul.f32 %v653, %v539
          %v808 = vmul.f32 %v649, %v540
          %v809 = vmul.f32 %v653, %v541
          %v810 = vmul.f32 %v657, %v538
          %v811 = vmul.f32 %v661, %v539
          %v812 = vmul.f32 %v657, %v540
          %v813 = vmul.f32 %v661, %v541
          %v814 = vmul.f32 %v665, %v538
          %v815 = vmul.f32 %v669, %v539
          %v816 = vmul.f32 %v665, %v540
          %v817 = vmul.f32 %v669, %v541
          %v818 = vmul.f32 %v673, %v538
          %v819 = vmul.f32 %v677, %v539
          %v820 = vmul.f32 %v673, %v540
          %v821 = vmul.f32 %v677, %v541
          %v822 = vmul.f32 %v681, %v538
          %v823 = vmul.f32 %v685, %v539
          %v824 = vmul.f32 %v681, %v540
          %v825 = vmul.f32 %v685, %v541
          %v826 = vmul.f32 %v689, %v538
          %v827 = vmul.f32 %v693, %v539
          %v828 = vmul.f32 %v689, %v540
          %v829 = vmul.f32 %v693, %v541
          %v830 = vmul.f32 %v697, %v538
          %v831 = vmul.f32 %v701, %v539
          %v832 = vmul.f32 %v697, %v540
          %v833 = vmul.f32 %v701, %v541
          %v834 = vmul.f32 %v705, %v538
          %v835 = vmul.f32 %v709, %v539
          %v836 = vmul.f32 %v705, %v540
          %v837 = vmul.f32 %v709, %v541
          %v838 = vmul.f32 %v713, %v538
          %v839 = vmul.f32 %v717, %v539
          %v840 = vmul.f32 %v713, %v540
          %v841 = vmul.f32 %v717, %v541
          %v842 = vmul.f32 %v721, %v538
          %v843 = vmul.f32 %v725, %v539
          %v844 = vmul.f32 %v721, %v540
          %v845 = vmul.f32 %v725, %v541
          %v846 = vmul.f32 %v729, %v538
          %v847 = vmul.f32 %v733, %v539
          %v848 = vmul.f32 %v729, %v540
          %v849 = vmul.f32 %v733, %v541
          %v850 = vmul.f32 %v737, %v538
          %v851 = vmul.f32 %v741, %v539
          %v852 = vmul.f32 %v737, %v540
          %v853 = vmul.f32 %v741, %v541
          %v854 = vmul.f32 %v745, %v538
          %v855 = vmul.f32 %v749, %v539
          %v856 = vmul.f32 %v745, %v540
          %v857 = vmul.f32 %v749, %v541
          %v858 = vmul.f32 %v753, %v538
          %v859 = vmul.f32 %v757, %v539
          %v860 = vmul.f32 %v753, %v540
          %v861 = vmul.f32 %v757, %v541
          %v862 = vmul.f32 %v761, %v538
          %v863 = vmul.f32 %v765, %v539
          %v864 = vmul.f32 %v761, %v540
          %v865 = vmul.f32 %v765, %v541
          %v866 = vmul.f32 %v769, %v538
          %v867 = vmul.f32 %v773, %v539
          %v868 = vmul.f32 %v769, %v540
          %v869 = vmul.f32 %v773, %v541
          %v870 = vpack.c.bf16 %v808, %v806
          %v871 = vpack.c.bf16 %v809, %v807
          %v872 = vpack.c.bf16 %v812, %v810
          %v873 = vpack.c.bf16 %v813, %v811
          %v874 = vpack.c.bf16 %v816, %v814
          %v875 = vpack.c.bf16 %v817, %v815
          %v876 = vpack.c.bf16 %v820, %v818
          %v877 = vpack.c.bf16 %v821, %v819
          %v878 = vpack.c.bf16 %v824, %v822
          %v879 = vpack.c.bf16 %v825, %v823
          %v880 = vpack.c.bf16 %v828, %v826
          %v881 = vpack.c.bf16 %v829, %v827
          %v882 = vpack.c.bf16 %v832, %v830
          %v883 = vpack.c.bf16 %v833, %v831
          %v884 = vpack.c.bf16 %v836, %v834
          %v885 = vpack.c.bf16 %v837, %v835
          %v886 = vpack.c.bf16 %v840, %v838
          %v887 = vpack.c.bf16 %v841, %v839
          %v888 = vpack.c.bf16 %v844, %v842
          %v889 = vpack.c.bf16 %v845, %v843
          %v890 = vpack.c.bf16 %v848, %v846
          %v891 = vpack.c.bf16 %v849, %v847
          %v892 = vpack.c.bf16 %v852, %v850
          %v893 = vpack.c.bf16 %v853, %v851
          %v894 = vpack.c.bf16 %v856, %v854
          %v895 = vpack.c.bf16 %v857, %v855
          %v896 = vpack.c.bf16 %v860, %v858
          %v897 = vpack.c.bf16 %v861, %v859
          %v898 = vpack.c.bf16 %v864, %v862
          %v899 = vpack.c.bf16 %v865, %v863
          %v900 = vpack.c.bf16 %v868, %v866
          %v901 = vpack.c.bf16 %v869, %v867
          %v904 = vunpack.c.l.b16 %v374
          %v905 = vunpack.c.h.b16 %v374
          %v906 = vunpack.c.l.b16 %v375
          %v907 = vunpack.c.h.b16 %v375
          %v908 = vpack.c.b16 %v906, %v904
          %v909 = vpack.c.b16 %v907, %v905
          %912 = vmatprep.subr.bf16.mxu0 %v871
          %913 = vmatpush1.bf16.msra.mxu0 %v870
          %914 = vmatprep.subr.bf16.mxu0 %v873
          %915 = vmatpush1.bf16.msra.mxu0 %v872
          %916 = vmatprep.subr.bf16.mxu0 %v875
          %917 = vmatpush1.bf16.msra.mxu0 %v874
          %918 = vmatprep.subr.bf16.mxu0 %v877
          %919 = vmatpush1.bf16.msra.mxu0 %v876
          %920 = vmatprep.subr.bf16.mxu0 %v879
          %921 = vmatpush1.bf16.msra.mxu0 %v878
          %922 = vmatprep.subr.bf16.mxu0 %v881
          %923 = vmatpush1.bf16.msra.mxu0 %v880
          %924 = vmatprep.subr.bf16.mxu0 %v883
          %925 = vmatpush1.bf16.msra.mxu0 %v882
          %926 = vmatprep.subr.bf16.mxu0 %v885
          %927 = vmatpush1.bf16.msra.mxu0 %v884
          %928 = vmatprep.subr.bf16.mxu0 %v887
          %929 = vmatpush1.bf16.msra.mxu0 %v886
          %930 = vmatprep.subr.bf16.mxu0 %v889
          %931 = vmatpush1.bf16.msra.mxu0 %v888
          %932 = vmatprep.subr.bf16.mxu0 %v891
          %933 = vmatpush1.bf16.msra.mxu0 %v890
          %934 = vmatprep.subr.bf16.mxu0 %v893
          %935 = vmatpush1.bf16.msra.mxu0 %v892
          %936 = vmatprep.subr.bf16.mxu0 %v895
          %937 = vmatpush1.bf16.msra.mxu0 %v894
          %938 = vmatprep.subr.bf16.mxu0 %v897
          %939 = vmatpush1.bf16.msra.mxu0 %v896
          %940 = vmatprep.subr.bf16.mxu0 %v899
          %941 = vmatpush1.bf16.msra.mxu0 %v898
          %942 = vmatprep.subr.bf16.mxu0 %v901
          %943 = vmatpush1.bf16.msra.mxu0 %v900
          %944 = vmatprep.mubr.bf16.mxu0 %v909
          %945 = vmatmul.mubr.bf16.gmra.mrb[0].mxu0 %v908
          %v946 = vpop.f32.mrb[0].mxu0
          %v947 = vadd.f32 0.0, %v946
          %v948 = vpop.f32.mrb[0].mxu0
          %v949 = vadd.f32 0.0, %v948
          %v950 = vpop.f32.mrb[0].mxu0
          %v951 = vadd.f32 0.0, %v950
          %v952 = vpop.f32.mrb[0].mxu0
          %v953 = vadd.f32 0.0, %v952
          %954 = vdwg.mxu0
          %s955 = smul.u32 %s380, 16
          %v956 = vpack.c.bf16 %v951, %v947
          %v957 = vpack.c.bf16 %v953, %v949
          %s958 = sshra.s32 %s955, 4
          %s959 = sand.u32 %s955, 15
          %s960 = smul.u32 %s958, 2
          %s961 = smul.addr %s960, 8
          %s962 = scalar_lea.vmem [#allocation2], %s961
          %963 = vst [vmem:[%s962] sm:$0xff] %v956
          %964 = vst [vmem:[%s962 + $0x8] sm:$0xff] %v957
        $region49: #{tpu_custom_call.1} parent=43 // loop_footer
          %s384 = sadd.s32 1, %s380
        $region50: #{tpu_custom_call.1} parent=43 // loop_footer_branch
          %379 = sbr.rel target = $region46
        $region51: #{tpu_custom_call.1} parent=43 // loop_exit
          _
        %v965 = vld [vmem:[%s4] sm:$0xff]
        %v966 = vld [vmem:[#allocation2] sm:$0xff]
        %v967 = vld [vmem:[#allocation2 + $0x8] sm:$0xff]
        %v968 = vld [vmem:[#allocation2 + $0x10] sm:$0xff]
        %v969 = vld [vmem:[#allocation2 + $0x18] sm:$0xff]
        %v970 = vld [vmem:[#allocation2 + $0x20] sm:$0xff]
        %v971 = vld [vmem:[#allocation2 + $0x28] sm:$0xff]
        %v972 = vld [vmem:[#allocation2 + $0x30] sm:$0xff]
        %v973 = vld [vmem:[#allocation2 + $0x38] sm:$0xff]
        %v974 = vld [vmem:[#allocation2 + $0x40] sm:$0xff]
        %v975 = vld [vmem:[#allocation2 + $0x48] sm:$0xff]
        %v976 = vld [vmem:[#allocation2 + $0x50] sm:$0xff]
        %v977 = vld [vmem:[#allocation2 + $0x58] sm:$0xff]
        %v978 = vld [vmem:[#allocation2 + $0x60] sm:$0xff]
        %v979 = vld [vmem:[#allocation2 + $0x68] sm:$0xff]
        %v980 = vld [vmem:[#allocation2 + $0x70] sm:$0xff]
        %v981 = vld [vmem:[#allocation2 + $0x78] sm:$0xff]
        %v982 = vld [vmem:[#allocation2 + $0x80] sm:$0xff]
        %v983 = vld [vmem:[#allocation2 + $0x88] sm:$0xff]
        %v984 = vld [vmem:[%s5] sm:$0xff]
        %986 = vset.pattern.permute.xlu0 0
        %987 = vperm.xlu0 %986, %v984
        %v988 = vpop.permute.xlu0 %987
        %v991 = vunpack.c.l.b16 %v965
        %v992 = vunpack.c.h.b16 %v965
        %v993 = vpack.c.b16 %v991, %v991
        %v994 = vpack.c.b16 %v992, %v992
        %vm996 = vcmask 130048
        %v998 = vsel %vm996, %v994, 0
        %1000 = vmatprep.subr.bf16.mxu0 %v967
        %1001 = vmatpush1.bf16.msra.mxu0 %v966
        %1002 = vmatprep.subr.bf16.mxu0 %v969
        %1003 = vmatpush1.bf16.msra.mxu0 %v968
        %1004 = vmatprep.subr.bf16.mxu0 %v971
        %1005 = vmatpush1.bf16.msra.mxu0 %v970
        %1006 = vmatprep.subr.bf16.mxu0 %v973
        %1007 = vmatpush1.bf16.msra.mxu0 %v972
        %1008 = vmatprep.subr.bf16.mxu0 %v975
        %1009 = vmatpush1.bf16.msra.mxu0 %v974
        %1010 = vmatprep.subr.bf16.mxu0 %v977
        %1011 = vmatpush1.bf16.msra.mxu0 %v976
        %1012 = vmatprep.subr.bf16.mxu0 %v979
        %1013 = vmatpush1.bf16.msra.mxu0 %v978
        %1014 = vmatprep.subr.bf16.mxu0 %v981
        %1015 = vmatpush1.bf16.msra.mxu0 %v980
        %1016 = vmatprep.subr.bf16.mxu0 %v983
        %1017 = vmatpush1.bf16.msra.mxu0 %v982
        %1018 = vmatprep.subr.bf16.mxu0 0
        %1019 = vmatpush1.bf16.msra.mxu0 0
        %1020 = vmatprep.subr.bf16.mxu0 0
        %1021 = vmatpush1.bf16.msra.mxu0 0
        %1022 = vmatprep.subr.bf16.mxu0 0
        %1023 = vmatpush1.bf16.msra.mxu0 0
        %1024 = vmatprep.subr.bf16.mxu0 0
        %1025 = vmatpush1.bf16.msra.mxu0 0
        %1026 = vmatprep.subr.bf16.mxu0 0
        %1027 = vmatpush1.bf16.msra.mxu0 0
        %1028 = vmatprep.subr.bf16.mxu0 0
        %1029 = vmatpush1.bf16.msra.mxu0 0
        %1030 = vmatprep.subr.bf16.mxu0 0
        %1031 = vmatpush1.bf16.msra.mxu0 0
        %1032 = vmatprep.mubr.bf16.mxu0 %v998
        %1033 = vmatmul.mubr.bf16.gmra.mrb[0].mxu0 %v993
        %v1034 = vpop.f32.mrb[0].mxu0
        %v1035 = vadd.f32 %v988, %v1034
        %v1036 = vpop.f32.mrb[0].mxu0
        %v1037 = vadd.f32 %v988, %v1036
        %v1038 = vpop.f32.mrb[0].mxu0
        %v1039 = vpop.f32.mrb[0].mxu0
        %1040 = vdwg.mxu0
        %v1041 = vmax.f32 %v1035, 0.0
        %v1042 = vmax.f32 %v1037, 0.0
        %v1043 = vmin.f32 %v1041, 6.0
        %v1044 = vmin.f32 %v1042, 6.0
        %1045 = vst [vmem:[%s336] sm:$0xff] %v1043
        %1046 = vst [vmem:[%s336 + $0x8] sm:$0xff] %v1044
        %s1047 = sand.u32 %s194, 1
        %s1048 = scalar_lea.sflag [#allocation4], %s1047
        %s1049 = sand.u32 %s194, 1
        %s1050 = smul.addr %s1049, 16
        %s1051 = scalar_lea.vmem [#allocation3], %s1050
        // Predicated region
        $region52: #{tpu_custom_call.1} parent=43 // pred_check
          %p1052 = pneg %p204
        $region53: #{tpu_custom_call.1} parent=43 // pred_check_branch
          %1054 = sbr.rel (%p1052) target = $region55
        $region54: #{tpu_custom_call.1} parent=43 // pred_region
          %s1055 = smul.u32 2, %s25
          %s1057 = ssub.s32 256, 256
          %1058 = vsyncadd %s1048, %s1057
          %s1059 = smul.addr %s24, 2
          %s1060 = sadd.s32 %s1055, %s1059
          %s1061 = smul.addr %s1060, 128
          %s1062 = scalar_lea.hbm %s6, %s1061
          %s1064 = sshll.u32 %s1051, 4
          %s1065 = int_to_ptr.vmem [resolvable:$true] %s1064
          %1067 = dma.vmem_to_hbm [thread:$0]  %s1065, 256, %s1062, %s1048
        $region55: #{tpu_custom_call.1} parent=43 // pred_fallthru
          _
      $region44: #{tpu_custom_call.1} parent=5 // pred_fallthru
        _
      %p1068 = scmp.le.s32.totalorder 2, %s15
      // Predicated region
      $region56: #{tpu_custom_call.1} parent=5 // pred_check
        %p1069 = pneg %p1068
      $region57: #{tpu_custom_call.1} parent=5 // pred_check_branch
        %1071 = sbr.rel (%p1069) target = $region59
      $region58: #{tpu_custom_call.1} parent=5 // pred_region
        %s1072 = ssub.s32 %s15, 2
        // Predicated region
        $region60: #{tpu_custom_call.1} parent=58 // pred_check
          %p1073 = pneg %p210
        $region61: #{tpu_custom_call.1} parent=58 // pred_check_branch
          %1075 = sbr.rel (%p1073) target = $region63
        $region62: #{tpu_custom_call.1} parent=58 // pred_region
          %s1076 = sand.u32 %s195, 1
          %s1077 = scalar_lea.sflag [#allocation4], %s1076
          %s1078 = sand.u32 %s195, 1
          %s1079 = smul.addr %s1078, 16
          %s1080 = scalar_lea.vmem [#allocation3], %s1079
          %1081 = dma.done %s1077, 256
        $region63: #{tpu_custom_call.1} parent=58 // pred_fallthru
          _
      $region59: #{tpu_custom_call.1} parent=5 // pred_fallthru
        _
    $region6: #{tpu_custom_call.1} parent=1 // loop_footer
      %s19 = sadd.s32 1, %s15
    $region7: #{tpu_custom_call.1} parent=1 // loop_footer_branch
      %14 = sbr.rel target = $region3
    $region8: #{tpu_custom_call.1} parent=1 // loop_exit
      _
    %1082 = vsyncpa [#allocation4], 1
    %s1083 = scalar_lea.sflag [#allocation4], 1
    %1084 = vsyncpa %s1083, 1

</llo_original>
